<compile_context>
chip_gen: v7x
topology: tpu7x:2x2x1
jax: 0.10.0
libtpu: 0.0.40
codegen_flags: <defaults>
</compile_context>

<pallas_src>
import jax
import jax.numpy as jnp
from jax.experimental import pallas as pl
from jax.experimental.pallas import tpu as pltpu


# Below ~1 vreg (4 KiB) a kernel is pure launch/DMA-descriptor overhead for
# zero useful work -> just return x.
_MIN_KERNEL_BYTES = 4096


def _dma_identity_kernel(x_hbm_ref, o_hbm_ref, sem):
    # Whole-array HBM -> HBM copy via the DMA engine.  No VMEM round trip.
    cp = pltpu.make_async_copy(x_hbm_ref, o_hbm_ref, sem)
    cp.start()
    cp.wait()


def _identity_dma_copy(x2d):
    """Single-shot HBM->HBM DMA identity copy of a 2-D array."""
    nbytes = x2d.size * x2d.dtype.itemsize
    return pl.pallas_call(
        _dma_identity_kernel,
        out_shape=jax.ShapeDtypeStruct(x2d.shape, x2d.dtype),
        in_specs=[pl.BlockSpec(memory_space=pl.ANY)],
        out_specs=pl.BlockSpec(memory_space=pl.ANY),
        scratch_shapes=[pltpu.SemaphoreType.DMA],
        cost_estimate=pl.CostEstimate(
            flops=0, transcendentals=0, bytes_accessed=2 * nbytes
        ),
    )(x2d)


def _as_2d_lane_dense(x):
    """Reshape to [rows, cols] with cols a large multiple of 128 when possible.

    For the DMA path the copy is contiguous bytes either way; this just keeps
    the presented layout lane-dense (and works for any rank / odd sizes).
    """
    total = x.size
    for cols in (8192, 4096, 2048, 1024, 512, 256, 128):
        if total % cols == 0:
            return x.reshape(total // cols, cols)
    # Not divisible by 128: single contiguous row (still a plain linear DMA).
    return x.reshape(1, total)


def identity_op(x, *args, **kwargs):
    """IdentityOp.forward(x) -> x."""
    x = jnp.asarray(x)
    # Short-circuit: empty / scalar / tiny inputs -> no kernel, zero cost.
    if x.size == 0 or x.size * x.dtype.itemsize < _MIN_KERNEL_BYTES:
        return x
    orig_shape = x.shape
    x2d = _as_2d_lane_dense(x)
    y2d = _identity_dma_copy(x2d)
    return y2d.reshape(orig_shape)


class IdentityOp:
    """Placeholder for IdentityOp(x) -> x."""

    def __init__(self, *args, **kwargs):
        pass

    def forward(self, x, *args, **kwargs):
        return identity_op(x)

    __call__ = forward


class IdentityFuncOp(IdentityOp):
    """Placeholder for IdentityFuncOp(...)(x) -> IdentityOp(x) -> x."""

    def __init__(self, *args, **kwargs):
        super().__init__()

    def forward(self, *args, **kwargs):
        # Returns the identity function itself (mirrors `return super().forward`).
        return identity_op

    __call__ = forward


if __name__ == "__main__":
    key = jax.random.PRNGKey(0)
    # Small NCHW-like input; 2*4*16*16*4B = 8 KiB, so the DMA kernel path runs.
    x = jax.random.normal(key, (2, 4, 16, 16), dtype=jnp.float32)

    func_op = IdentityFuncOp()
    fn = func_op()              # forward(...) -> the identity function
    y = jax.block_until_ready(fn(x))

    assert y.shape == x.shape and y.dtype == x.dtype
    assert bool(jnp.all(y == x))

    # Also exercise the tiny-input short-circuit (no kernel launched).
    s = jnp.float32(3.5)
    assert bool(fn(s) == s)

    print("KERNEL_OK")
</pallas_src>

<mosaic_0001>
module attributes {stable_mosaic.version = 11 : i64} {
  func.func @_dma_identity_kernel(%arg0: memref<1x2048xf32, #tpu.memory_space<any>>, %arg1: memref<1x2048xf32, #tpu.memory_space<any>>, %arg2: memref<!tpu.dma_semaphore, #tpu.memory_space<semaphore_mem>>) attributes {dimension_semantics = [], scalar_prefetch = 0 : i64, scratch_operands = 1 : i64, tpu.core_type = #tpu.core_type<tc>} {
    tpu.enqueue_dma source(%arg0 : memref<1x2048xf32, #tpu.memory_space<any>>) target(%arg1 : memref<1x2048xf32, #tpu.memory_space<any>>) target_semaphore(%arg2 : memref<!tpu.dma_semaphore, #tpu.memory_space<semaphore_mem>>)
    tpu.wait_dma2 semaphore(%arg2 : memref<!tpu.dma_semaphore, #tpu.memory_space<semaphore_mem>>) src(%arg0 : memref<1x2048xf32, #tpu.memory_space<any>>) dst(%arg1 : memref<1x2048xf32, #tpu.memory_space<any>>)
    return
  }
}

</mosaic_0001>

<llo_original>
// kernel: tpu_custom_call.1
$region0: #{tpu_custom_call.1}
  #allocation0 [shape = 'u32[]', space=smem, size = 0x4, offset = 0x4, fixed_abs, tag = 'smem constant byte address 0x4 - core index']
  #allocation1 [shape = 'u32[144,128]{1,0:T(1,128)}', space=vmem, size = 0x12000, scoped, tag = 'internal scratch']
  #allocation2 [shape = 's32[1]{0}', space=sflag, size = 0x4, scoped, tag = 'scratch operand']
  #allocation3 [shape = 's32[]', space=sflag, size = 0x4, offset = 0, fixed_abs, tag = 'sflag constant byte address 0x0 - dummy sync flag']
  #allocation4 [shape = 'u32[0]{0}', space=smem, size = 0, offset = 0, fixed_abs, tag = 'smem constant byte address 0x0 - null']
  %s0 = inlined_call_operand.hbm [shape: f32[1,2048], index: 0, kind: input, shape index: {}]
  %s1 = inlined_call_operand.hbm [shape: f32[1,2048], index: 1, kind: output, shape index: {}]
  %s2 = sld [smem:[#allocation0]]
  $region2: #{tpu_custom_call.1} parent=0
    _
  %s4 = ssub.s32 1, %s2
  %s5 = scalar_select 0, %s4, %s2
  %s7 = sshll.u32 1, 14
  %s8 = sxor.u32 4294967295, %s7
  %s11 = sshll.u32 3, 24
  %s12 = sxor.u32 4294967295, %s11
  %s13 = sand.u32 0, %s12
  %s15 = sor.u32 %s13, 0
  %18 = dma.general %s0, 256, %s1, [#allocation2], [#allocation3], [#allocation4], %s15, 0
  %s19 = smul.u32 1, 16
  %s20 = sshll.u32 %s19, 4
  %21 = dma.done [#allocation2], %s20
  %22 = vsyncmov [#allocation2]
  %s23 = vpop.sfrf %22
  %p24 = scmp.eq.s32.totalorder %s23, 0
  %p25 = pneg %p24
  %27 = shalt.err (%p25)

</llo_original>
